<compile_context>
chip_gen: v7x
topology: tpu7x:2x2x1
jax: 0.10.0
libtpu: 0.0.40
codegen_flags: <defaults>
</compile_context>

<pallas_src>
import math

import jax
import jax.numpy as jnp
from jax.experimental import pallas as pl
from jax.experimental.pallas import tpu as pltpu

_LANE = 128
_NEG = -1e30                      # Python float: "minus infinity" that exps to 0 cleanly
_TARGET_BLOCK_BYTES = 4 << 20     # per-grid-step input DMA target
_MAX_BLOCK_BYTES = 12 << 20       # hard cap so 2x buffered block stays well inside VMEM
_CHUNK_ELEMS = 48 * 1024          # per-chunk f32 working set (~192 KiB ~ 48 vregs)


def _make_kernel(Tt: int, nT: int, Tc: int, tail_valid: int):
    """Kernel over blocks x:(Bb,Tt,Cb) -> lse:(Bb,1,Cb) f32 with online logsumexp."""

    def kernel(alpha_ref, x_ref, o_ref, m_sc, s_sc):
        # alpha_ref: SMEM (1,) f32 (scalar prefetch)
        # x_ref:     VMEM (Bb, Tt, Cb)
        # o_ref:     VMEM (Bb, 1, Cb) f32   (resident across the T grid axis)
        # m_sc/s_sc: VMEM (Bb, 1, Cb) f32   (running max / rescaled sum)
        t = pl.program_id(2)
        alpha = alpha_ref[0]

        @pl.when(t == 0)
        def _init():
            m_sc[...] = jnp.full(m_sc.shape, _NEG, jnp.float32)
            s_sc[...] = jnp.zeros(s_sc.shape, jnp.float32)

        def load(start, size):
            # per-chunk upcast + temperature scale (never a full f32 tile)
            return x_ref[:, pl.ds(start, size), :].astype(jnp.float32) * alpha

        def update(xs, m, s):
            m_new = jnp.maximum(m, jnp.max(xs, axis=1, keepdims=True))
            s_new = s * jnp.exp(m - m_new) + jnp.sum(
                jnp.exp(xs - m_new), axis=1, keepdims=True)
            return m_new, s_new

        def process(valid: int):
            # `valid` is a static Python int: number of real rows in this tile.
            m, s = m_sc[...], s_sc[...]
            n_full = valid // Tc
            if n_full == 1:
                m, s = update(load(0, Tc), m, s)
            elif n_full > 1:
                def body(c, carry):
                    start = pl.multiple_of(c * Tc, Tc)
                    return update(load(start, Tc), *carry)
                m, s = jax.lax.fori_loop(0, n_full, body, (m, s))
            rem = valid - n_full * Tc
            if rem > 0:
                size = min(Tc, Tt - n_full * Tc)        # static, in-bounds in block
                xs = load(n_full * Tc, size)
                if rem < size:                          # mask only when padding exists
                    ids = jax.lax.broadcasted_iota(jnp.int32, xs.shape, 1)
                    xs = jnp.where(ids < rem, xs, _NEG)
                m, s = update(xs, m, s)
            m_sc[...] = m
            s_sc[...] = s

        if tail_valid == Tt:
            process(Tt)                                 # every tile is full
        else:
            @pl.when(t < nT - 1)
            def _full_tile():
                process(Tt)

            @pl.when(t == nT - 1)
            def _tail_tile():
                process(tail_valid)

        @pl.when(t == nT - 1)
        def _finalize():
            o_ref[...] = jnp.log(s_sc[...]) + m_sc[...]

    return kernel


def autopool1d(x: jax.Array, alpha, *, block_t: int | None = None,
               chunk_t: int | None = None) -> jax.Array:
    """AutoPool1D forward.  x: (B, T, C) -> (B, C) float32."""
    B, T, C = x.shape
    orig_T, orig_C = T, C

    # ---- fold T into the lane axis when C is not lane-dense (no padding pass) ----
    fold = 1
    if C % _LANE != 0:
        k = _LANE // math.gcd(C, _LANE)
        if T % k == 0 and k * C <= 4096:
            fold = k
            x = x.reshape(B, T // k, k * C)             # contiguous: free reshape
    _, Tw, Cw = x.shape

    itemsize = x.dtype.itemsize
    sub = {4: 8, 2: 16, 1: 32}.get(itemsize, 8)

    # ---- channel blocking (extra parallel axis; mainly helps v7x dual-TC) ----
    Cb = 512 if (Cw >= 1024 and Cw % 512 == 0) else Cw
    nC = Cw // Cb

    # ---- batch blocking: batch rows per grid step so each DMA is sizeable ----
    row_bytes = Tw * Cb * itemsize
    Bb = max(1, min(B, _TARGET_BLOCK_BYTES // max(row_bytes, 1)))
    Bb = min(Bb, max(1, _CHUNK_ELEMS // (sub * Cb)))    # keep chunk vreg set bounded
    while B % Bb != 0:
        Bb -= 1
    nB = B // Bb

    # ---- T tiling (reduction axis, innermost grid dim) ----
    per_row_bytes = Bb * Cb * itemsize
    if block_t is None:
        Tt = max(sub, (_TARGET_BLOCK_BYTES // per_row_bytes) // sub * sub)
    else:
        Tt = max(sub, (block_t // sub) * sub)
    max_rows = max(sub, (_MAX_BLOCK_BYTES // per_row_bytes) // sub * sub)
    Tt = min(Tt, max_rows)
    if Tt >= Tw:
        Tt = Tw                                          # full-dim block is always legal

    # ---- chunk rows inside a tile (bounds the per-chunk f32 working set) ----
    Tc = chunk_t if chunk_t is not None else max(1, _CHUNK_ELEMS // (Bb * Cb))
    Tc = max(1, min(Tc, Tt))
    if Tc >= sub:
        Tc = (Tc // sub) * sub
    if Tt < Tw:
        # multi-tile: keep every non-tail tile an exact multiple of the chunk
        Tc = max(sub, (Tc // sub) * sub)
        Tt = max(Tc, (Tt // Tc) * Tc)
    nT = pl.cdiv(Tw, Tt)
    tail_valid = Tw - (nT - 1) * Tt

    in_block_bytes = Bb * Tt * Cb * itemsize
    vmem_limit = int(min(32 << 20, max(16 << 20, 2 * in_block_bytes + (6 << 20))))

    alpha_arr = jnp.asarray(alpha, dtype=jnp.float32).reshape((1,))
    kernel = _make_kernel(Tt, nT, Tc, tail_valid)

    out = pl.pallas_call(
        kernel,
        out_shape=jax.ShapeDtypeStruct((B, 1, Cw), jnp.float32),
        grid_spec=pltpu.PrefetchScalarGridSpec(
            num_scalar_prefetch=1,                       # alpha -> SMEM
            grid=(nB, nC, nT),                           # reduction (T) axis last
            in_specs=[pl.BlockSpec((Bb, Tt, Cb), lambda b, c, t, a: (b, t, c))],
            out_specs=pl.BlockSpec((Bb, 1, Cb), lambda b, c, t, a: (b, 0, c)),
            scratch_shapes=[pltpu.VMEM((Bb, 1, Cb), jnp.float32),   # running max
                            pltpu.VMEM((Bb, 1, Cb), jnp.float32)],  # running sum
        ),
        compiler_params=pltpu.CompilerParams(
            dimension_semantics=("parallel", "parallel", "arbitrary"),
            vmem_limit_bytes=vmem_limit),
        cost_estimate=pl.CostEstimate(
            flops=int(3 * B * Tw * Cw),
            transcendentals=int(B * Tw * Cw),
            bytes_accessed=int(B * Tw * Cw * itemsize + B * Cw * 4)),
    )(alpha_arr, x)

    lse = out[:, 0, :]                                   # (B, Cw) f32, per-lane lse
    if fold > 1:
        # combine the `fold` lane groups per channel (tiny (B, k, C) epilogue)
        lse = jax.scipy.special.logsumexp(lse.reshape(B, fold, orig_C), axis=1)
    alpha_f = jnp.asarray(alpha, dtype=jnp.float32)
    return (lse - math.log(orig_T)) / alpha_f


if __name__ == "__main__":
    key = jax.random.PRNGKey(0)
    k0, k1, k2 = jax.random.split(key, 3)

    # Like the PyTorch module, alpha == 0 is undefined (division by alpha).
    alpha = jnp.float32(1.0)

    def reference(x, alpha):
        T = x.shape[1]
        xf = x.astype(jnp.float32)
        return (jax.scipy.special.logsumexp(xf * alpha, axis=1) - math.log(T)) / alpha

    # 1) small shape, default tiling (C=32 folded into 128 lanes, single tile)
    B, T, C = 2, 64, 32
    x = jax.random.normal(k0, (B, T, C), dtype=jnp.float32)
    out = jax.block_until_ready(autopool1d(x, alpha))
    assert out.shape == (B, C)
    assert jnp.allclose(out, reference(x, alpha), atol=1e-5, rtol=1e-5)

    # 2) multi-tile online-logsumexp path (folded T split across grid steps)
    out2 = jax.block_until_ready(autopool1d(x, alpha, block_t=8, chunk_t=8))
    assert jnp.allclose(out2, reference(x, alpha), atol=1e-5, rtol=1e-5)

    # 3) non-divisible T: masked remainder chunk, traced only for the last tile
    x3 = jax.random.normal(k1, (B, 40, C), dtype=jnp.float32)
    out3 = jax.block_until_ready(autopool1d(x3, alpha, block_t=8, chunk_t=8))
    assert jnp.allclose(out3, reference(x3, alpha), atol=1e-5, rtol=1e-5)

    # 4) channel count that cannot be folded (full-dim C block fallback, tail mask)
    x4 = jax.random.normal(k2, (2, 40, 24), dtype=jnp.float32)
    out4 = jax.block_until_ready(autopool1d(x4, alpha, block_t=16))
    assert jnp.allclose(out4, reference(x4, alpha), atol=1e-5, rtol=1e-5)

    # 5) bf16 input (per-chunk f32 upcast inside the kernel, f32 accumulators)
    x5 = jax.random.normal(k0, (B, T, C), dtype=jnp.bfloat16)
    out5 = jax.block_until_ready(autopool1d(x5, alpha))
    assert jnp.allclose(out5, reference(x5, alpha), atol=1e-4, rtol=1e-4)

    print("KERNEL_OK")
</pallas_src>

<mosaic_0001>
module attributes {stable_mosaic.version = 11 : i64} {
  func.func @kernel(%arg0: i32, %arg1: i32, %arg2: i32, %arg3: memref<1xf32, #tpu.memory_space<smem>>, %arg4: memref<2x16x128xf32, #tpu.memory_space<vmem>>, %arg5: memref<2x1x128xf32, #tpu.memory_space<vmem>>, %arg6: memref<2x1x128xf32, #tpu.memory_space<vmem>>, %arg7: memref<2x1x128xf32, #tpu.memory_space<vmem>>) attributes {dimension_semantics = [#tpu.dimension_semantics<parallel>, #tpu.dimension_semantics<parallel>, #tpu.dimension_semantics<arbitrary>], iteration_bounds = array<i64: 1, 1, 1>, scalar_prefetch = 1 : i64, scratch_operands = 2 : i64, tpu.core_type = #tpu.core_type<tc>, window_params = [{transform_indices = @transform_0, window_bounds = array<i64: 2, 16, 128>}, {transform_indices = @transform_1, window_bounds = array<i64: 2, 1, 128>}]} {
    %c0 = arith.constant 0 : index
    %0 = memref.load %arg3[%c0] : memref<1xf32, #tpu.memory_space<smem>>
    %c0_i32 = arith.constant 0 : i32
    %1 = arith.cmpi eq, %arg2, %c0_i32 : i32
    %2 = arith.extui %1 : i1 to i32
    %c0_i32_0 = arith.constant 0 : i32
    %3 = arith.cmpi ne, %2, %c0_i32_0 : i32
    scf.if %3 {
      %cst_19 = arith.constant -1.000000e+30 : f32
      %26 = vector.broadcast %cst_19 : f32 to vector<2x1x128xf32>
      %c0_20 = arith.constant 0 : index
      %c0_21 = arith.constant 0 : index
      %c0_22 = arith.constant 0 : index
      %27 = vector.load %arg6[%c0_20, %c0_21, %c0_22] : memref<2x1x128xf32, #tpu.memory_space<vmem>>, vector<2x1x128xf32>
      tpu.vector_store %arg6[%c0_20, %c0_21, %c0_22], %26 {strides = array<i32>} : memref<2x1x128xf32, #tpu.memory_space<vmem>>, vector<2x1x128xf32>,
      %cst_23 = arith.constant 0.000000e+00 : f32
      %28 = vector.broadcast %cst_23 : f32 to vector<2x1x128xf32>
      %c0_24 = arith.constant 0 : index
      %c0_25 = arith.constant 0 : index
      %c0_26 = arith.constant 0 : index
      %29 = vector.load %arg7[%c0_24, %c0_25, %c0_26] : memref<2x1x128xf32, #tpu.memory_space<vmem>>, vector<2x1x128xf32>
      tpu.vector_store %arg7[%c0_24, %c0_25, %c0_26], %28 {strides = array<i32>} : memref<2x1x128xf32, #tpu.memory_space<vmem>>, vector<2x1x128xf32>,
    } else {
    }
    %c0_1 = arith.constant 0 : index
    %c0_2 = arith.constant 0 : index
    %c0_3 = arith.constant 0 : index
    %4 = vector.load %arg6[%c0_1, %c0_2, %c0_3] : memref<2x1x128xf32, #tpu.memory_space<vmem>>, vector<2x1x128xf32>
    %c0_4 = arith.constant 0 : index
    %c0_5 = arith.constant 0 : index
    %c0_6 = arith.constant 0 : index
    %5 = vector.load %arg7[%c0_4, %c0_5, %c0_6] : memref<2x1x128xf32, #tpu.memory_space<vmem>>, vector<2x1x128xf32>
    %c0_7 = arith.constant 0 : index
    %c0_8 = arith.constant 0 : index
    %c0_9 = arith.constant 0 : index
    %6 = vector.load %arg4[%c0_7, %c0_8, %c0_9] : memref<2x16x128xf32, #tpu.memory_space<vmem>>, vector<2x16x128xf32>
    %7 = vector.broadcast %0 : f32 to vector<2x16x128xf32>
    %8 = arith.mulf %6, %7 : vector<2x16x128xf32>
    %cst = arith.constant dense<0xFF800000> : vector<2x128xf32>
    %9 = vector.multi_reduction <maximumf>, %8, %cst [1] : vector<2x16x128xf32> to vector<2x128xf32>
    %10 = vector.shape_cast %9 : vector<2x128xf32> to vector<2x1x128xf32>
    %11 = arith.maximumf %4, %10 : vector<2x1x128xf32>
    %12 = arith.subf %4, %11 : vector<2x1x128xf32>
    %13 = math.exp %12 : vector<2x1x128xf32>
    %14 = arith.mulf %5, %13 : vector<2x1x128xf32>
    %15 = vector.broadcast %11 : vector<2x1x128xf32> to vector<2x16x128xf32>
    %16 = arith.subf %8, %15 : vector<2x16x128xf32>
    %17 = math.exp %16 : vector<2x16x128xf32>
    %cst_10 = arith.constant dense<0.000000e+00> : vector<2x128xf32>
    %18 = vector.multi_reduction <add>, %17, %cst_10 [1] : vector<2x16x128xf32> to vector<2x128xf32>
    %19 = vector.shape_cast %18 : vector<2x128xf32> to vector<2x1x128xf32>
    %20 = arith.addf %14, %19 : vector<2x1x128xf32>
    %c0_11 = arith.constant 0 : index
    %c0_12 = arith.constant 0 : index
    %c0_13 = arith.constant 0 : index
    %21 = vector.load %arg6[%c0_11, %c0_12, %c0_13] : memref<2x1x128xf32, #tpu.memory_space<vmem>>, vector<2x1x128xf32>
    tpu.vector_store %arg6[%c0_11, %c0_12, %c0_13], %11 {strides = array<i32>} : memref<2x1x128xf32, #tpu.memory_space<vmem>>, vector<2x1x128xf32>,
    %c0_14 = arith.constant 0 : index
    %c0_15 = arith.constant 0 : index
    %c0_16 = arith.constant 0 : index
    %22 = vector.load %arg7[%c0_14, %c0_15, %c0_16] : memref<2x1x128xf32, #tpu.memory_space<vmem>>, vector<2x1x128xf32>
    tpu.vector_store %arg7[%c0_14, %c0_15, %c0_16], %20 {strides = array<i32>} : memref<2x1x128xf32, #tpu.memory_space<vmem>>, vector<2x1x128xf32>,
    %c0_i32_17 = arith.constant 0 : i32
    %23 = arith.cmpi eq, %arg2, %c0_i32_17 : i32
    %24 = arith.extui %23 : i1 to i32
    %c0_i32_18 = arith.constant 0 : i32
    %25 = arith.cmpi ne, %24, %c0_i32_18 : i32
    scf.if %25 {
      %c0_19 = arith.constant 0 : index
      %c0_20 = arith.constant 0 : index
      %c0_21 = arith.constant 0 : index
      %26 = vector.load %arg7[%c0_19, %c0_20, %c0_21] : memref<2x1x128xf32, #tpu.memory_space<vmem>>, vector<2x1x128xf32>
      %27 = math.log %26 : vector<2x1x128xf32>
      %c0_22 = arith.constant 0 : index
      %c0_23 = arith.constant 0 : index
      %c0_24 = arith.constant 0 : index
      %28 = vector.load %arg6[%c0_22, %c0_23, %c0_24] : memref<2x1x128xf32, #tpu.memory_space<vmem>>, vector<2x1x128xf32>
      %29 = arith.addf %27, %28 : vector<2x1x128xf32>
      %c0_25 = arith.constant 0 : index
      %c0_26 = arith.constant 0 : index
      %c0_27 = arith.constant 0 : index
      %30 = vector.load %arg5[%c0_25, %c0_26, %c0_27] : memref<2x1x128xf32, #tpu.memory_space<vmem>>, vector<2x1x128xf32>
      tpu.vector_store %arg5[%c0_25, %c0_26, %c0_27], %29 {strides = array<i32>} : memref<2x1x128xf32, #tpu.memory_space<vmem>>, vector<2x1x128xf32>,
    } else {
    }
    return
  }
  func.func @transform_0(%arg0: i32, %arg1: i32, %arg2: i32, %arg3: memref<1xf32, #tpu.memory_space<smem>>) -> (i32, i32, i32) {
    %c0_i32 = arith.constant 0 : i32
    return %arg0, %arg2, %arg1 : i32, i32, i32
  }
  func.func @transform_1(%arg0: i32, %arg1: i32, %arg2: i32, %arg3: memref<1xf32, #tpu.memory_space<smem>>) -> (i32, i32, i32) {
    %c0_i32 = arith.constant 0 : i32
    %c0_i32_0 = arith.constant 0 : i32
    return %arg0, %c0_i32, %arg1 : i32, i32, i32
  }
}

</mosaic_0001>

<llo_original>
// kernel: tpu_custom_call.1
$region0: #{tpu_custom_call.1}
  #allocation0 [shape = 'u32[]', space=smem, size = 0x4, offset = 0x4, fixed_abs, tag = 'smem constant byte address 0x4 - core index']
  #allocation1 [shape = 'u32[144,128]{1,0:T(1,128)}', space=vmem, size = 0x12000, scoped, tag = 'internal scratch']
  #allocation2 [shape = 'f32[2,1,128]{2,1,0:T(1,128)}', space=vmem, size = 0x400, scoped, tag = 'scratch operand']
  #allocation3 [shape = 'f32[2,1,128]{2,1,0:T(1,128)}', space=vmem, size = 0x400, scoped, tag = 'scratch operand']
  #allocation4 [shape = 's32[1]{0}', space=sflag, size = 0x4, scoped, tag = 'scoped memory for tpu_custom_call.1']
  #allocation5 [shape = 'f32[1]{0:T(128)S(6)}', space=smem, size = 0x200, scoped, tag = 'prefetched SMEM operand 0']
  %s0 = inlined_call_operand.<no memory space> [shape: f32[1], index: 0, kind: input, shape index: {}]
  %s1 = inlined_call_operand.hbm [shape: f32[2,16,128], index: 1, kind: input, shape index: {}]
  %s2 = inlined_call_operand.hbm [shape: f32[2,1,128], index: 2, kind: output, shape index: {}]
  %s3 = sld [smem:[#allocation0]]
  $region26: #{tpu_custom_call.1} parent=0
    _
  %s5 = ssub.s32 1, %s3
  %s6 = scalar_select 0, %s5, %s3
  %7 = sst [smem:[#allocation5]] %s0
  $region1: #{tpu_custom_call.1} parent=0
    #allocation6 [shape = 'u8[16384]{0}', space=vmem, size = 0x4000, scoped, tag = 'input window, operand 1, single buffered']
    #allocation7 [shape = 's32[1]{0}', space=sflag, size = 0x4, scoped, tag = 'scoped memory for tpu_custom_call.1']
    #allocation8 [shape = 's32[1]{0}', space=sflag, size = 0x4, scoped, tag = 'scoped memory for tpu_custom_call.1']
    #allocation9 [shape = 'u8[1024]{0}', space=vmem, size = 0x400, scoped, tag = 'output window, operand 0, single buffered']
    %8 = vsyncpa [#allocation7], 0
    %9 = vsyncpa [#allocation8], 0
    // Predicated region
    $region2: #{tpu_custom_call.1} parent=1 // pred_check
      _
    $region3: #{tpu_custom_call.1} parent=1 // pred_check_branch
      %11 = sbr.rel (0) target = $region5
    $region4: #{tpu_custom_call.1} parent=1 // pred_region
      %s13 = ssub.s32 512, 512
      %14 = vsyncadd [#allocation7], %s13
      %s15 = sshll.u32 [#allocation6], 4
      %s16 = int_to_ptr.vmem [resolvable:$true] %s15
      %21 = dma.hbm_to_vmem [thread:$0]  %s1, 512, %s16, [#allocation7], 128, 128, 8
    $region5: #{tpu_custom_call.1} parent=1 // pred_fallthru
      _
    // Predicated region
    $region6: #{tpu_custom_call.1} parent=1 // pred_check
      _
    $region7: #{tpu_custom_call.1} parent=1 // pred_check_branch
      %23 = sbr.rel (0) target = $region9
    $region8: #{tpu_custom_call.1} parent=1 // pred_region
      %24 = dma.done [#allocation7], 512
    $region9: #{tpu_custom_call.1} parent=1 // pred_fallthru
      _
    %s25 = sld [smem:[#allocation5]]
    %p26 = scmp.eq.s32.totalorder 0, 0
    // Predicated region
    $region10: #{tpu_custom_call.1} parent=1 // pred_check
      %p27 = pneg %p26
    $region11: #{tpu_custom_call.1} parent=1 // pred_check_branch
      %29 = sbr.rel (%p27) target = $region13
    $region12: #{tpu_custom_call.1} parent=1 // pred_region
      %30 = vst [vmem:[#allocation2] sm:$0x1] -1e+30
      %31 = vst [vmem:[#allocation2 + $0x1] sm:$0x1] -1e+30
      %32 = vst [vmem:[#allocation3] sm:$0x1] 0.0
      %33 = vst [vmem:[#allocation3 + $0x1] sm:$0x1] 0.0
    $region13: #{tpu_custom_call.1} parent=1 // pred_fallthru
      _
    %v34 = vld [vmem:[#allocation2] sm:$0x1]
    %v35 = vld [vmem:[#allocation2 + $0x1] sm:$0x1]
    %v36 = vld [vmem:[#allocation3] sm:$0x1]
    %v37 = vld [vmem:[#allocation3 + $0x1] sm:$0x1]
    %v38 = vld [vmem:[#allocation6] sm:$0xff]
    %v39 = vld [vmem:[#allocation6 + $0x8] sm:$0xff]
    %v40 = vld [vmem:[#allocation6 + $0x10] sm:$0xff]
    %v41 = vld [vmem:[#allocation6 + $0x18] sm:$0xff]
    %v42 = vstv %s25
    %v43 = vmul.f32 %v38, %v42
    %v44 = vmul.f32 %v39, %v42
    %v45 = vmul.f32 %v40, %v42
    %v46 = vmul.f32 %v41, %v42
    %v47 = vmax.f32 %v43, %v44
    %v48 = vrot.slane %v47, 4
    %v49 = vmax.f32 %v47, %v48
    %v50 = vrot.slane %v49, 2
    %v51 = vmax.f32 %v49, %v50
    %v52 = vrot.slane %v51, 1
    %v53 = vmax.f32 %v51, %v52
    %v54 = vmax.f32 %v45, %v46
    %v55 = vrot.slane %v54, 4
    %v56 = vmax.f32 %v54, %v55
    %v57 = vrot.slane %v56, 2
    %v58 = vmax.f32 %v56, %v57
    %v59 = vrot.slane %v58, 1
    %v60 = vmax.f32 %v58, %v59
    %v61 = vmax.f32 %v34, %v53
    %v62 = vmax.f32 %v35, %v60
    %v63 = vsub.f32 %v34, %v61
    %v64 = vsub.f32 %v35, %v62
    %v65 = vmul.f32 %v63, 1.442695
    %v66 = vpow.pop %v65
    %v67 = vmul.f32 %v64, 1.442695
    %v68 = vpow.pop %v67
    %v69 = vmul.f32 %v36, %v66
    %v70 = vmul.f32 %v37, %v68
    %v73 = vlaneseq
    %v74 = vshrl.u32 %v73, 7
    %v75 = vsub.s32 0, %v74
    %v76 = vrot.slane %v61, %v75
    %v77 = vlaneseq
    %v78 = vshrl.u32 %v77, 7
    %v79 = vsub.s32 0, %v78
    %v80 = vrot.slane %v62, %v79
    %v83 = vsub.f32 %v43, %v76
    %v84 = vsub.f32 %v44, %v76
    %v85 = vsub.f32 %v45, %v80
    %v86 = vsub.f32 %v46, %v80
    %v87 = vmul.f32 %v83, 1.442695
    %v88 = vpow.pop %v87
    %v89 = vmul.f32 %v84, 1.442695
    %v90 = vpow.pop %v89
    %v91 = vmul.f32 %v85, 1.442695
    %v92 = vpow.pop %v91
    %v93 = vmul.f32 %v86, 1.442695
    %v94 = vpow.pop %v93
    %v95 = vadd.f32 %v88, %v90
    %v96 = vrot.slane %v95, 4
    %v97 = vadd.f32 %v95, %v96
    %v98 = vrot.slane %v97, 2
    %v99 = vadd.f32 %v97, %v98
    %v100 = vrot.slane %v99, 1
    %v101 = vadd.f32 %v99, %v100
    %v102 = vadd.f32 %v92, %v94
    %v103 = vrot.slane %v102, 4
    %v104 = vadd.f32 %v102, %v103
    %v105 = vrot.slane %v104, 2
    %v106 = vadd.f32 %v104, %v105
    %v107 = vrot.slane %v106, 1
    %v108 = vadd.f32 %v106, %v107
    %v109 = vadd.f32 %v69, %v101
    %v110 = vadd.f32 %v70, %v108
    %111 = vst [vmem:[#allocation2] sm:$0x1] %v61
    %112 = vst [vmem:[#allocation2 + $0x1] sm:$0x1] %v62
    %113 = vst [vmem:[#allocation3] sm:$0x1] %v109
    %114 = vst [vmem:[#allocation3 + $0x1] sm:$0x1] %v110
    // Predicated region
    $region14: #{tpu_custom_call.1} parent=1 // pred_check
      %p115 = pneg %p26
    $region15: #{tpu_custom_call.1} parent=1 // pred_check_branch
      %117 = sbr.rel (%p115) target = $region17
    $region16: #{tpu_custom_call.1} parent=1 // pred_region
      %v118 = vld [vmem:[#allocation3] sm:$0x1]
      %v119 = vld [vmem:[#allocation3 + $0x1] sm:$0x1]
      %v120 = vlog2.pop %v118
      %v121 = vmul.f32 %v120, 0.6931472
      %v122 = vlog2.pop %v119
      %v123 = vmul.f32 %v122, 0.6931472
      %v124 = vld [vmem:[#allocation2] sm:$0x1]
      %v125 = vld [vmem:[#allocation2 + $0x1] sm:$0x1]
      %v126 = vadd.f32 %v121, %v124
      %v127 = vadd.f32 %v123, %v125
      %128 = vst [vmem:[#allocation9] sm:$0x1] %v126
      %129 = vst [vmem:[#allocation9 + $0x1] sm:$0x1] %v127
    $region17: #{tpu_custom_call.1} parent=1 // pred_fallthru
      _
    // Predicated region
    $region18: #{tpu_custom_call.1} parent=1 // pred_check
      _
    $region19: #{tpu_custom_call.1} parent=1 // pred_check_branch
      %131 = sbr.rel (0) target = $region21
    $region20: #{tpu_custom_call.1} parent=1 // pred_region
      %s133 = ssub.s32 32, 32
      %134 = vsyncadd [#allocation8], %s133
      %s135 = sshll.u32 [#allocation9], 4
      %s136 = int_to_ptr.vmem [resolvable:$true] %s135
      %141 = dma.vmem_to_hbm [thread:$0]  %s136, 32, %s2, [#allocation8], 16, 16, 1
    $region21: #{tpu_custom_call.1} parent=1 // pred_fallthru
      _
    // Predicated region
    $region22: #{tpu_custom_call.1} parent=1 // pred_check
      _
    $region23: #{tpu_custom_call.1} parent=1 // pred_check_branch
      %143 = sbr.rel (0) target = $region25
    $region24: #{tpu_custom_call.1} parent=1 // pred_region
      %144 = dma.done [#allocation8], 32
    $region25: #{tpu_custom_call.1} parent=1 // pred_fallthru
      _
    %145 = vsyncpa [#allocation7], 1
    %146 = vsyncpa [#allocation8], 1

</llo_original>
